<compile_context>
chip_gen: v6e
topology: v6e:2x2x1
jax: 0.10.0
libtpu: 0.0.40
codegen_flags: <defaults>
</compile_context>

<pallas_src>
import functools

import numpy as np
import jax
import jax.numpy as jnp
from jax.experimental import pallas as pl
from jax.experimental.pallas import tpu as pltpu

# ---- module hyper-parameters (scaled-down but structurally identical to the
# production MT3-style constants: FFT_SIZE=2048, HOP_WIDTH=128, NUM_MEL_BINS=512) ----
SAMPLING_RATE = 16000
FFT_SIZE = 256
HOP_WIDTH = 128
NUM_MEL_BINS = 128          # multiple of 128 -> lane-dense output stores
MEL_LO_HZ = 20.0
MEL_HI_HZ = SAMPLING_RATE / 2.0
INT16_MAX = 32768.0
EPS = 1e-5                  # self.eps in the PyTorch module

N_FREQS = FFT_SIZE // 2 + 1           # onesided rfft bins
R_STEPS = FFT_SIZE // HOP_WIDTH       # shifted-chunk accumulation steps
assert FFT_SIZE % HOP_WIDTH == 0  # TODO(synk): general hop needs an explicit frame-gather path


# ----------------------------- constants ------------------------------------
def melscale_fbanks_htk(n_freqs, f_min, f_max, n_mels, sample_rate):
    """Replicates torchaudio.functional.melscale_fbanks(mel_scale='htk', norm=None)."""
    all_freqs = np.linspace(0.0, sample_rate // 2, n_freqs)

    def hz_to_mel(f):
        return 2595.0 * np.log10(1.0 + f / 700.0)

    def mel_to_hz(m):
        return 700.0 * (10.0 ** (m / 2595.0) - 1.0)

    m_pts = np.linspace(hz_to_mel(f_min), hz_to_mel(f_max), n_mels + 2)
    f_pts = mel_to_hz(m_pts)
    f_diff = f_pts[1:] - f_pts[:-1]                      # (n_mels + 1,)
    slopes = f_pts[None, :] - all_freqs[:, None]         # (n_freqs, n_mels + 2)
    down = -slopes[:, :-2] / f_diff[:-1]
    up = slopes[:, 2:] / f_diff[1:]
    fb = np.maximum(0.0, np.minimum(down, up))           # (n_freqs, n_mels)
    return fb.astype(np.float32)


def make_dft_basis():
    """Onesided DFT basis (rectangular window) with 1/INT16_MAX folded in."""
    n = np.arange(FFT_SIZE, dtype=np.float64)
    f = np.arange(N_FREQS, dtype=np.float64)
    ang = 2.0 * np.pi * np.outer(n, f) / FFT_SIZE        # (FFT_SIZE, N_FREQS)
    cos_b = (np.cos(ang) / INT16_MAX).astype(np.float32)
    sin_b = (-np.sin(ang) / INT16_MAX).astype(np.float32)
    return jnp.asarray(cos_b), jnp.asarray(sin_b)


# ------------------------------- kernel -------------------------------------
def _spectrogram_kernel(chunks_ref, cos_ref, sin_ref, mel_ref, out_ref, *, n_frames):
    # chunks_ref: (1, n_chunks, HOP_WIDTH)  raw audio samples, hop-sized chunks
    # cos_ref/sin_ref: (FFT_SIZE, N_FREQS)  DFT basis, pre-scaled by 1/INT16_MAX
    # mel_ref: (N_FREQS, NUM_MEL_BINS)      mel filterbank
    # out_ref: (1, n_frames, NUM_MEL_BINS)  log-mel output
    real = None
    imag = None
    for r in range(R_STEPS):                              # static unroll (R_STEPS = FFT/HOP)
        xr = chunks_ref[0, r:r + n_frames, :]             # (n_frames, HOP_WIDTH)
        cr = cos_ref[r * HOP_WIDTH:(r + 1) * HOP_WIDTH, :]
        sr = sin_ref[r * HOP_WIDTH:(r + 1) * HOP_WIDTH, :]
        pr = jnp.dot(xr, cr, preferred_element_type=jnp.float32)
        pi = jnp.dot(xr, sr, preferred_element_type=jnp.float32)
        real = pr if real is None else real + pr
        imag = pi if imag is None else imag + pi

    mag = jnp.sqrt(real * real + imag * imag)             # |STFT|, (n_frames, N_FREQS)
    mel = jnp.dot(mag, mel_ref[...], preferred_element_type=jnp.float32)
    out_ref[0] = jnp.log(jnp.where(mel <= 0.0, jnp.float32(EPS), mel))


# ------------------------------- wrapper ------------------------------------
@jax.jit
def spectrogram(audios, cos_basis, sin_basis, mel_fbanks):
    B, L = audios.shape
    x = audios.astype(jnp.float32)                        # .float(); /INT16_MAX folded into basis
    n_frames = 1 + (L - FFT_SIZE) // HOP_WIDTH
    n_chunks = n_frames + R_STEPS - 1
    chunks = x[:, :n_chunks * HOP_WIDTH].reshape(B, n_chunks, HOP_WIDTH)
    n_mels = mel_fbanks.shape[1]

    kernel = functools.partial(_spectrogram_kernel, n_frames=n_frames)

    return pl.pallas_call(
        kernel,
        out_shape=jax.ShapeDtypeStruct((B, n_frames, n_mels), jnp.float32),
        grid_spec=pltpu.PrefetchScalarGridSpec(
            num_scalar_prefetch=0,
            grid=(B,),
            in_specs=[
                pl.BlockSpec((1, n_chunks, HOP_WIDTH), lambda b: (b, 0, 0)),
                pl.BlockSpec((FFT_SIZE, N_FREQS), lambda b: (0, 0)),
                pl.BlockSpec((FFT_SIZE, N_FREQS), lambda b: (0, 0)),
                pl.BlockSpec((N_FREQS, n_mels), lambda b: (0, 0)),
            ],
            out_specs=pl.BlockSpec((1, n_frames, n_mels), lambda b: (b, 0, 0)),
        ),
        compiler_params=pltpu.CompilerParams(
            dimension_semantics=("parallel",)),
    )(chunks, cos_basis, sin_basis, mel_fbanks)


# ----------------------------- references -----------------------------------
def _frames(x):
    B, L = x.shape
    T = 1 + (L - FFT_SIZE) // HOP_WIDTH
    idx = HOP_WIDTH * jnp.arange(T)[:, None] + jnp.arange(FFT_SIZE)[None, :]
    return x[:, idx]                                      # (B, T, FFT_SIZE)


def spectrogram_ref_matmul(audios, cos_basis, sin_basis, mel_fbanks):
    """Same math as the kernel (DFT-by-matmul), in plain JAX."""
    frames = _frames(audios.astype(jnp.float32))
    hi = jax.lax.Precision.HIGHEST
    real = jnp.einsum("btn,nf->btf", frames, cos_basis, precision=hi)
    imag = jnp.einsum("btn,nf->btf", frames, sin_basis, precision=hi)
    mag = jnp.sqrt(real * real + imag * imag)
    mel = jnp.einsum("btf,fm->btm", mag, mel_fbanks, precision=hi)
    return jnp.log(jnp.where(mel <= 0.0, jnp.float32(EPS), mel))


def spectrogram_ref_fft(audios, mel_fbanks):
    """torch.stft-semantics reference (center=False, rectangular window) via rfft."""
    frames = _frames(audios.astype(jnp.float32) / INT16_MAX)
    spec = jnp.fft.rfft(frames, n=FFT_SIZE, axis=-1)      # (B, T, N_FREQS)
    mag = jnp.abs(spec).astype(jnp.float32)
    mel = jnp.einsum("btf,fm->btm", mag, mel_fbanks,
                     precision=jax.lax.Precision.HIGHEST)
    return jnp.log(jnp.where(mel <= 0.0, jnp.float32(EPS), mel))


# --------------------------------- main -------------------------------------
if __name__ == "__main__":
    B = 2
    n_frames = 16
    L = (n_frames - 1) * HOP_WIDTH + FFT_SIZE             # 2176 samples

    key = jax.random.PRNGKey(0)
    audios = jax.random.randint(key, (B, L), -32768, 32768, dtype=jnp.int32)

    cos_basis, sin_basis = make_dft_basis()
    mel_fbanks = jnp.asarray(
        melscale_fbanks_htk(N_FREQS, MEL_LO_HZ, MEL_HI_HZ, NUM_MEL_BINS, SAMPLING_RATE))

    out = spectrogram(audios, cos_basis, sin_basis, mel_fbanks)
    out = jax.block_until_ready(out)
    assert out.shape == (B, n_frames, NUM_MEL_BINS)

    # Tight check: identical math (folded DFT basis) in plain JAX.
    ref_mm = spectrogram_ref_matmul(audios, cos_basis, sin_basis, mel_fbanks)
    assert jnp.allclose(out, ref_mm, atol=1e-2, rtol=1e-2), "mismatch vs matmul reference"

    # Semantics check: true STFT (rfft) path, matching torch.stft behavior.
    ref_fft = spectrogram_ref_fft(audios, mel_fbanks)
    assert jnp.allclose(out, ref_fft, atol=1e-1, rtol=1e-1), "mismatch vs FFT reference"

    print("KERNEL_OK")
</pallas_src>

<mosaic_0001>
module attributes {stable_mosaic.version = 11 : i64} {
  func.func @_spectrogram_kernel(%arg0: i32, %arg1: memref<1x17x128xf32, #tpu.memory_space<vmem>>, %arg2: memref<256x129xf32, #tpu.memory_space<vmem>>, %arg3: memref<256x129xf32, #tpu.memory_space<vmem>>, %arg4: memref<129x128xf32, #tpu.memory_space<vmem>>, %arg5: memref<1x16x128xf32, #tpu.memory_space<vmem>>) attributes {dimension_semantics = [#tpu.dimension_semantics<parallel>], iteration_bounds = array<i64: 2>, scalar_prefetch = 0 : i64, scratch_operands = 0 : i64, tpu.core_type = #tpu.core_type<tc>, window_params = [{transform_indices = @transform_0, window_bounds = array<i64: 1, 17, 128>}, {pipeline_mode = #tpu.pipeline_mode<synchronous>, transform_indices = @transform_1, window_bounds = array<i64: 256, 129>}, {pipeline_mode = #tpu.pipeline_mode<synchronous>, transform_indices = @transform_2, window_bounds = array<i64: 256, 129>}, {pipeline_mode = #tpu.pipeline_mode<synchronous>, transform_indices = @transform_3, window_bounds = array<i64: 129, 128>}, {transform_indices = @transform_4, window_bounds = array<i64: 1, 16, 128>}]} {
    %c0 = arith.constant 0 : index
    %c0_0 = arith.constant 0 : index
    %c0_1 = arith.constant 0 : index
    %0 = vector.load %arg1[%c0, %c0_0, %c0_1] : memref<1x17x128xf32, #tpu.memory_space<vmem>>, vector<1x16x128xf32>
    %1 = vector.shape_cast %0 : vector<1x16x128xf32> to vector<16x128xf32>
    %c0_2 = arith.constant 0 : index
    %c0_3 = arith.constant 0 : index
    %2 = vector.load %arg2[%c0_2, %c0_3] : memref<256x129xf32, #tpu.memory_space<vmem>>, vector<128x129xf32>
    %c0_4 = arith.constant 0 : index
    %c0_5 = arith.constant 0 : index
    %3 = vector.load %arg3[%c0_4, %c0_5] : memref<256x129xf32, #tpu.memory_space<vmem>>, vector<128x129xf32>
    %cst = arith.constant dense<0.000000e+00> : vector<16x129xf32>
    %4 = tpu.matmul %1, %2, %cst {dimension_numbers = #tpu.dot_dimension_numbers<[1], [0], [0], [1], [0, 0, 1, 1], [], []>} : vector<16x128xf32>, vector<128x129xf32>, vector<16x129xf32> -> vector<16x129xf32>
    %cst_6 = arith.constant dense<0.000000e+00> : vector<16x129xf32>
    %5 = tpu.matmul %1, %3, %cst_6 {dimension_numbers = #tpu.dot_dimension_numbers<[1], [0], [0], [1], [0, 0, 1, 1], [], []>} : vector<16x128xf32>, vector<128x129xf32>, vector<16x129xf32> -> vector<16x129xf32>
    %c0_7 = arith.constant 0 : index
    %c1 = arith.constant 1 : index
    %c0_8 = arith.constant 0 : index
    %6 = vector.load %arg1[%c0_7, %c1, %c0_8] : memref<1x17x128xf32, #tpu.memory_space<vmem>>, vector<1x16x128xf32>
    %7 = vector.shape_cast %6 : vector<1x16x128xf32> to vector<16x128xf32>
    %c128 = arith.constant 128 : index
    %c0_9 = arith.constant 0 : index
    %8 = vector.load %arg2[%c128, %c0_9] : memref<256x129xf32, #tpu.memory_space<vmem>>, vector<128x129xf32>
    %c128_10 = arith.constant 128 : index
    %c0_11 = arith.constant 0 : index
    %9 = vector.load %arg3[%c128_10, %c0_11] : memref<256x129xf32, #tpu.memory_space<vmem>>, vector<128x129xf32>
    %cst_12 = arith.constant dense<0.000000e+00> : vector<16x129xf32>
    %10 = tpu.matmul %7, %8, %cst_12 {dimension_numbers = #tpu.dot_dimension_numbers<[1], [0], [0], [1], [0, 0, 1, 1], [], []>} : vector<16x128xf32>, vector<128x129xf32>, vector<16x129xf32> -> vector<16x129xf32>
    %cst_13 = arith.constant dense<0.000000e+00> : vector<16x129xf32>
    %11 = tpu.matmul %7, %9, %cst_13 {dimension_numbers = #tpu.dot_dimension_numbers<[1], [0], [0], [1], [0, 0, 1, 1], [], []>} : vector<16x128xf32>, vector<128x129xf32>, vector<16x129xf32> -> vector<16x129xf32>
    %12 = arith.addf %4, %10 : vector<16x129xf32>
    %13 = arith.addf %5, %11 : vector<16x129xf32>
    %14 = arith.mulf %12, %12 : vector<16x129xf32>
    %15 = arith.mulf %13, %13 : vector<16x129xf32>
    %16 = arith.addf %14, %15 : vector<16x129xf32>
    %17 = math.sqrt %16 : vector<16x129xf32>
    %c0_14 = arith.constant 0 : index
    %c0_15 = arith.constant 0 : index
    %18 = vector.load %arg4[%c0_14, %c0_15] : memref<129x128xf32, #tpu.memory_space<vmem>>, vector<129x128xf32>
    %cst_16 = arith.constant dense<0.000000e+00> : vector<16x128xf32>
    %19 = tpu.matmul %17, %18, %cst_16 {dimension_numbers = #tpu.dot_dimension_numbers<[1], [0], [0], [1], [0, 0, 1, 1], [], []>} : vector<16x129xf32>, vector<129x128xf32>, vector<16x128xf32> -> vector<16x128xf32>
    %cst_17 = arith.constant 0.000000e+00 : f32
    %20 = vector.broadcast %cst_17 : f32 to vector<16x128xf32>
    %21 = arith.cmpf ole, %19, %20 : vector<16x128xf32>
    %cst_18 = arith.constant 9.99999974E-6 : f32
    %22 = vector.broadcast %cst_18 : f32 to vector<16x128xf32>
    %23 = arith.select %21, %22, %19 : vector<16x128xi1>, vector<16x128xf32>
    %24 = math.log %23 : vector<16x128xf32>
    %c0_19 = arith.constant 0 : index
    %c0_20 = arith.constant 0 : index
    %c0_21 = arith.constant 0 : index
    %25 = vector.load %arg5[%c0_19, %c0_20, %c0_21] : memref<1x16x128xf32, #tpu.memory_space<vmem>>, vector<1x16x128xf32>
    %26 = vector.shape_cast %25 : vector<1x16x128xf32> to vector<16x128xf32>
    %27 = vector.shape_cast %24 : vector<16x128xf32> to vector<1x16x128xf32>
    tpu.vector_store %arg5[%c0_19, %c0_20, %c0_21], %27 {strides = array<i32>} : memref<1x16x128xf32, #tpu.memory_space<vmem>>, vector<1x16x128xf32>,
    return
  }
  func.func @transform_0(%arg0: i32) -> (i32, i32, i32) {
    %c0_i32 = arith.constant 0 : i32
    %c0_i32_0 = arith.constant 0 : i32
    %c0_i32_1 = arith.constant 0 : i32
    return %arg0, %c0_i32, %c0_i32_0 : i32, i32, i32
  }
  func.func @transform_1(%arg0: i32) -> (i32, i32) {
    %c0_i32 = arith.constant 0 : i32
    %c0_i32_0 = arith.constant 0 : i32
    %c0_i32_1 = arith.constant 0 : i32
    return %c0_i32, %c0_i32_0 : i32, i32
  }
  func.func @transform_2(%arg0: i32) -> (i32, i32) {
    %c0_i32 = arith.constant 0 : i32
    %c0_i32_0 = arith.constant 0 : i32
    %c0_i32_1 = arith.constant 0 : i32
    return %c0_i32, %c0_i32_0 : i32, i32
  }
  func.func @transform_3(%arg0: i32) -> (i32, i32) {
    %c0_i32 = arith.constant 0 : i32
    %c0_i32_0 = arith.constant 0 : i32
    %c0_i32_1 = arith.constant 0 : i32
    return %c0_i32, %c0_i32_0 : i32, i32
  }
  func.func @transform_4(%arg0: i32) -> (i32, i32, i32) {
    %c0_i32 = arith.constant 0 : i32
    %c0_i32_0 = arith.constant 0 : i32
    %c0_i32_1 = arith.constant 0 : i32
    return %arg0, %c0_i32, %c0_i32_0 : i32, i32, i32
  }
}

</mosaic_0001>

<llo_original>
// kernel: spectrogram.1
$region0: #{spectrogram.1}
  #allocation0 [shape = 'u32[]', space=smem, size = 0x4, offset = 0x4, fixed_abs, tag = 'smem constant byte address 0x4 - core index']
  #allocation1 [shape = 'u32[144,128]{1,0:T(1,128)}', space=vmem, size = 0x12000, scoped, tag = 'internal scratch']
  %s0 = inlined_call_operand.vmem [shape: f32[2,17,128], index: 0, kind: input, shape index: {}]
  %s1 = inlined_call_operand.vmem [shape: f32[256,129], index: 1, kind: input, shape index: {}]
  %s2 = inlined_call_operand.vmem [shape: f32[256,129], index: 2, kind: input, shape index: {}]
  %s3 = inlined_call_operand.vmem [shape: f32[129,128], index: 3, kind: input, shape index: {}]
  %s4 = inlined_call_operand.hbm [shape: f32[2,16,128], index: 4, kind: output, shape index: {}]
  %s5 = sld [smem:[#allocation0]]
  $region49: #{spectrogram.1} parent=0
    _
  %s7 = ssub.s32 1, %s5
  %s8 = scalar_select 0, %s7, %s5
  $region1: #{spectrogram.1} parent=0
    #allocation2 [shape = 'u8[16384]{0}', space=vmem, size = 0x4000, scoped, tag = 'output window, operand 0']
    #allocation3 [shape = 's32[2]{0}', space=sflag, size = 0x8, scoped, tag = 'scoped memory for spectrogram.1']
    %9 = vsyncpa [#allocation3], 0
    %s10 = scalar_lea.sflag [#allocation3], 1
    %11 = vsyncpa %s10, 0
    loop: start=0, step=1, limit=4
    $region2: #{spectrogram.1} parent=1 // loop_pre_header
      _
    $region3: #{spectrogram.1} parent=1 // loop_header
      %s13 = sphi 0, %s17
      %p14 = scmp.ge.s32.totalorder %s13, 4
      %s23 = sphi 0, %s25
      %s26 = sphi 0, %s23
      %s27 = sphi 0, %s26
      %s43 = sphi 0, %s27
      %s47 = sphi 0, %s47
      %s49 = sphi 0, %s47
      %s50 = sphi 0, %s49
      %s64 = sphi 0, %s50
      %s68 = sphi 0, %s68
      %s70 = sphi 0, %s68
      %s71 = sphi 0, %s70
      %s85 = sphi 0, %s71
      %s89 = sphi 0, %s89
      %s91 = sphi 0, %s89
      %s92 = sphi 0, %s91
      %s106 = sphi 0, %s92
      %s112 = sphi 0, %s114
      %s115 = sphi 0, %s112
      %s116 = sphi 0, %s115
      %s132 = sphi 0, %s116
    $region4: #{spectrogram.1} parent=1 // loop_header_branch
      %16 = sbr.rel (%p14) target = $region8
    $region5: #{spectrogram.1} parent=1 // loop_body
      %s18 = ssub.s32 %s13, 1
      %s19 = ssub.s32 %s13, 2
      %s20 = sadd.s32 %s13, 1
      %s21 = ssub.s32 %s13, %s20
      %p22 = scmp.eq.s32.totalorder %s21, 0
      %s24 = sadd.s32 %s23, 1
      %s25 = scalar_select %p22, %s23, %s24
      %p28 = pneg %p22
      %p29 = scmp.eq.s32.totalorder %s13, 1
      %p30 = por %p28, %p29
      %p31 = scmp.ne.s32.totalorder %s23, %s26
      %p32 = scmp.eq.s32.totalorder %s13, 0
      %p33 = por %p31, %p32
      %p34 = scmp.ne.s32.totalorder %s23, %s26
      %p35 = scmp.eq.s32.totalorder %s18, 1
      %p36 = por %p34, %p35
      %p37 = scmp.ne.s32.totalorder %s26, %s27
      %p38 = scmp.eq.s32.totalorder %s18, 0
      %p39 = por %p37, %p38
      %p40 = scmp.ne.s32.totalorder %s26, %s27
      %p41 = scmp.eq.s32.totalorder %s19, 1
      %p42 = por %p40, %p41
      %p44 = scmp.ne.s32.totalorder %s27, %s43
      %p45 = scmp.eq.s32.totalorder %s19, 0
      %p46 = por %p44, %p45
      %s48 = sadd.s32 %s47, 1
      %p51 = scmp.eq.s32.totalorder %s13, 1
      %p52 = scmp.ne.s32.totalorder %s47, %s49
      %p53 = scmp.eq.s32.totalorder %s13, 0
      %p54 = por %p52, %p53
      %p55 = scmp.ne.s32.totalorder %s47, %s49
      %p56 = scmp.eq.s32.totalorder %s18, 1
      %p57 = por %p55, %p56
      %p58 = scmp.ne.s32.totalorder %s49, %s50
      %p59 = scmp.eq.s32.totalorder %s18, 0
      %p60 = por %p58, %p59
      %p61 = scmp.ne.s32.totalorder %s49, %s50
      %p62 = scmp.eq.s32.totalorder %s19, 1
      %p63 = por %p61, %p62
      %p65 = scmp.ne.s32.totalorder %s50, %s64
      %p66 = scmp.eq.s32.totalorder %s19, 0
      %p67 = por %p65, %p66
      %s69 = sadd.s32 %s68, 1
      %p72 = scmp.eq.s32.totalorder %s13, 1
      %p73 = scmp.ne.s32.totalorder %s68, %s70
      %p74 = scmp.eq.s32.totalorder %s13, 0
      %p75 = por %p73, %p74
      %p76 = scmp.ne.s32.totalorder %s68, %s70
      %p77 = scmp.eq.s32.totalorder %s18, 1
      %p78 = por %p76, %p77
      %p79 = scmp.ne.s32.totalorder %s70, %s71
      %p80 = scmp.eq.s32.totalorder %s18, 0
      %p81 = por %p79, %p80
      %p82 = scmp.ne.s32.totalorder %s70, %s71
      %p83 = scmp.eq.s32.totalorder %s19, 1
      %p84 = por %p82, %p83
      %p86 = scmp.ne.s32.totalorder %s71, %s85
      %p87 = scmp.eq.s32.totalorder %s19, 0
      %p88 = por %p86, %p87
      %s90 = sadd.s32 %s89, 1
      %p93 = scmp.eq.s32.totalorder %s13, 1
      %p94 = scmp.ne.s32.totalorder %s89, %s91
      %p95 = scmp.eq.s32.totalorder %s13, 0
      %p96 = por %p94, %p95
      %p97 = scmp.ne.s32.totalorder %s89, %s91
      %p98 = scmp.eq.s32.totalorder %s18, 1
      %p99 = por %p97, %p98
      %p100 = scmp.ne.s32.totalorder %s91, %s92
      %p101 = scmp.eq.s32.totalorder %s18, 0
      %p102 = por %p100, %p101
      %p103 = scmp.ne.s32.totalorder %s91, %s92
      %p104 = scmp.eq.s32.totalorder %s19, 1
      %p105 = por %p103, %p104
      %p107 = scmp.ne.s32.totalorder %s92, %s106
      %p108 = scmp.eq.s32.totalorder %s19, 0
      %p109 = por %p107, %p108
      %s110 = ssub.s32 %s13, %s20
      %p111 = scmp.eq.s32.totalorder %s110, 0
      %s113 = sadd.s32 %s112, 1
      %s114 = scalar_select %p111, %s112, %s113
      %p117 = pneg %p111
      %p118 = scmp.eq.s32.totalorder %s13, 1
      %p119 = por %p117, %p118
      %p120 = scmp.ne.s32.totalorder %s112, %s115
      %p121 = scmp.eq.s32.totalorder %s13, 0
      %p122 = por %p120, %p121
      %p123 = scmp.ne.s32.totalorder %s112, %s115
      %p124 = scmp.eq.s32.totalorder %s18, 1
      %p125 = por %p123, %p124
      %p126 = scmp.ne.s32.totalorder %s115, %s116
      %p127 = scmp.eq.s32.totalorder %s18, 0
      %p128 = por %p126, %p127
      %p129 = scmp.ne.s32.totalorder %s115, %s116
      %p130 = scmp.eq.s32.totalorder %s19, 1
      %p131 = por %p129, %p130
      %p133 = scmp.ne.s32.totalorder %s116, %s132
      %p134 = scmp.eq.s32.totalorder %s19, 0
      %p135 = por %p133, %p134
      %p136 = scmp.le.s32.totalorder 1, %s13
      %p137 = scmp.lt.s32.totalorder %s13, 3
      %p138 = pnand %p136, %p137
      %p139 = pneg %p138
      // Predicated region
      $region9: #{spectrogram.1} parent=5 // pred_check
        _
      $region10: #{spectrogram.1} parent=5 // pred_check_branch
        %141 = sbr.rel (%p138) target = $region12
      $region11: #{spectrogram.1} parent=5 // pred_region
        %s142 = ssub.s32 %s13, 1
        // Predicated region
        $region13: #{spectrogram.1} parent=11 // pred_check
          %p143 = pneg %p60
        $region14: #{spectrogram.1} parent=11 // pred_check_branch
          %145 = sbr.rel (%p143) target = $region16
        $region15: #{spectrogram.1} parent=11 // pred_region
          _
        $region16: #{spectrogram.1} parent=11 // pred_fallthru
          _
        // Predicated region
        $region17: #{spectrogram.1} parent=11 // pred_check
          %p146 = pneg %p81
        $region18: #{spectrogram.1} parent=11 // pred_check_branch
          %148 = sbr.rel (%p146) target = $region20
        $region19: #{spectrogram.1} parent=11 // pred_region
          _
        $region20: #{spectrogram.1} parent=11 // pred_fallthru
          _
        // Predicated region
        $region21: #{spectrogram.1} parent=11 // pred_check
          %p149 = pneg %p102
        $region22: #{spectrogram.1} parent=11 // pred_check_branch
          %151 = sbr.rel (%p149) target = $region24
        $region23: #{spectrogram.1} parent=11 // pred_region
          _
        $region24: #{spectrogram.1} parent=11 // pred_fallthru
          _
      $region12: #{spectrogram.1} parent=5 // pred_fallthru
        _
      %p152 = scmp.lt.s32.totalorder %s13, 2
      // Predicated region
      $region25: #{spectrogram.1} parent=5 // pred_check
        %p153 = pneg %p152
      $region26: #{spectrogram.1} parent=5 // pred_check_branch
        %155 = sbr.rel (%p153) target = $region28
      $region27: #{spectrogram.1} parent=5 // pred_region
        // Predicated region
        $region29: #{spectrogram.1} parent=27 // pred_check
          %p156 = pneg %p33
        $region30: #{spectrogram.1} parent=27 // pred_check_branch
          %158 = sbr.rel (%p156) target = $region32
        $region31: #{spectrogram.1} parent=27 // pred_region
          %p159 = scmp.lt.s32.totalorder %s13, 1
          %s160 = scalar_select %p159, %s13, 1
          %s161 = smul.addr %s160, 3
          %s162 = smul.addr %s161, 8
          %s163 = scalar_lea.vmem %s0, %s162
        $region32: #{spectrogram.1} parent=27 // pred_fallthru
          _
      $region28: #{spectrogram.1} parent=5 // pred_fallthru
        _
      %p164 = scmp.le.s32.totalorder 1, %s13
      %p165 = scmp.lt.s32.totalorder %s13, 3
      %p166 = pnand %p164, %p165
      %p167 = pneg %p166
      // Predicated region
      $region33: #{spectrogram.1} parent=5 // pred_check
        _
      $region34: #{spectrogram.1} parent=5 // pred_check_branch
        %169 = sbr.rel (%p166) target = $region36
      $region35: #{spectrogram.1} parent=5 // pred_region
        %s170 = ssub.s32 %s13, 1
        %p171 = scmp.lt.s32.totalorder %s18, 1
        %s172 = scalar_select %p171, %s18, 1
        %s173 = smul.addr %s172, 3
        %s174 = smul.addr %s173, 8
        %s175 = scalar_lea.vmem %s0, %s174
        %p176 = pneg %p39
        %p177 = pneg %p36
        %p178 = pneg %p60
        %p179 = pneg %p57
        %p180 = pneg %p81
        %p181 = pneg %p78
        %p182 = pneg %p102
        %p183 = pneg %p99
        %p184 = pneg %p128
        %p185 = pneg %p125
        %s186 = sand.u32 %s115, 1
        %s187 = scalar_lea.sflag [#allocation3], %s186
        %s188 = sand.u32 %s115, 1
        %s189 = smul.addr %s188, 16
        %s190 = scalar_lea.vmem [#allocation2], %s189
        %p191 = scmp.lt.s32.totalorder %s18, 1
        %s192 = scalar_select %p191, %s18, 1
        %s193 = smul.addr %s192, 3
        %s194 = smul.addr %s193, 8
        %s195 = scalar_lea.vmem %s0, %s194
        %v196 = vld [vmem:[%s195] sm:$0xff]
        %v197 = vld [vmem:[%s195 + $0x8] sm:$0xff]
        %v198 = vld [vmem:[%s1] sm:$0xff]
        %v199 = vld [vmem:[%s1 + $0x8] sm:$0xff]
        %v200 = vld [vmem:[%s1 + $0x10] sm:$0xff]
        %v201 = vld [vmem:[%s1 + $0x18] sm:$0xff]
        %v202 = vld [vmem:[%s1 + $0x20] sm:$0xff]
        %v203 = vld [vmem:[%s1 + $0x28] sm:$0xff]
        %v204 = vld [vmem:[%s1 + $0x30] sm:$0xff]
        %v205 = vld [vmem:[%s1 + $0x38] sm:$0xff]
        %v206 = vld [vmem:[%s1 + $0x40] sm:$0xff]
        %v207 = vld [vmem:[%s1 + $0x48] sm:$0xff]
        %v208 = vld [vmem:[%s1 + $0x50] sm:$0xff]
        %v209 = vld [vmem:[%s1 + $0x58] sm:$0xff]
        %v210 = vld [vmem:[%s1 + $0x60] sm:$0xff]
        %v211 = vld [vmem:[%s1 + $0x68] sm:$0xff]
        %v212 = vld [vmem:[%s1 + $0x70] sm:$0xff]
        %v213 = vld [vmem:[%s1 + $0x78] sm:$0xff]
        %v214 = vld [vmem:[%s1 + $0x80] sm:$0xff]
        %v215 = vld [vmem:[%s1 + $0x88] sm:$0xff]
        %v216 = vld [vmem:[%s1 + $0x90] sm:$0xff]
        %v217 = vld [vmem:[%s1 + $0x98] sm:$0xff]
        %v218 = vld [vmem:[%s1 + $0xa0] sm:$0xff]
        %v219 = vld [vmem:[%s1 + $0xa8] sm:$0xff]
        %v220 = vld [vmem:[%s1 + $0xb0] sm:$0xff]
        %v221 = vld [vmem:[%s1 + $0xb8] sm:$0xff]
        %v222 = vld [vmem:[%s1 + $0xc0] sm:$0xff]
        %v223 = vld [vmem:[%s1 + $0xc8] sm:$0xff]
        %v224 = vld [vmem:[%s1 + $0xd0] sm:$0xff]
        %v225 = vld [vmem:[%s1 + $0xd8] sm:$0xff]
        %v226 = vld [vmem:[%s1 + $0xe0] sm:$0xff]
        %v227 = vld [vmem:[%s1 + $0xe8] sm:$0xff]
        %v228 = vld [vmem:[%s1 + $0xf0] sm:$0xff]
        %v229 = vld [vmem:[%s1 + $0xf8] sm:$0xff]
        %v230 = vld [vmem:[%s2] sm:$0xff]
        %v231 = vld [vmem:[%s2 + $0x8] sm:$0xff]
        %v232 = vld [vmem:[%s2 + $0x10] sm:$0xff]
        %v233 = vld [vmem:[%s2 + $0x18] sm:$0xff]
        %v234 = vld [vmem:[%s2 + $0x20] sm:$0xff]
        %v235 = vld [vmem:[%s2 + $0x28] sm:$0xff]
        %v236 = vld [vmem:[%s2 + $0x30] sm:$0xff]
        %v237 = vld [vmem:[%s2 + $0x38] sm:$0xff]
        %v238 = vld [vmem:[%s2 + $0x40] sm:$0xff]
        %v239 = vld [vmem:[%s2 + $0x48] sm:$0xff]
        %v240 = vld [vmem:[%s2 + $0x50] sm:$0xff]
        %v241 = vld [vmem:[%s2 + $0x58] sm:$0xff]
        %v242 = vld [vmem:[%s2 + $0x60] sm:$0xff]
        %v243 = vld [vmem:[%s2 + $0x68] sm:$0xff]
        %v244 = vld [vmem:[%s2 + $0x70] sm:$0xff]
        %v245 = vld [vmem:[%s2 + $0x78] sm:$0xff]
        %v246 = vld [vmem:[%s2 + $0x80] sm:$0xff]
        %v247 = vld [vmem:[%s2 + $0x88] sm:$0xff]
        %v248 = vld [vmem:[%s2 + $0x90] sm:$0xff]
        %v249 = vld [vmem:[%s2 + $0x98] sm:$0xff]
        %v250 = vld [vmem:[%s2 + $0xa0] sm:$0xff]
        %v251 = vld [vmem:[%s2 + $0xa8] sm:$0xff]
        %v252 = vld [vmem:[%s2 + $0xb0] sm:$0xff]
        %v253 = vld [vmem:[%s2 + $0xb8] sm:$0xff]
        %v254 = vld [vmem:[%s2 + $0xc0] sm:$0xff]
        %v255 = vld [vmem:[%s2 + $0xc8] sm:$0xff]
        %v256 = vld [vmem:[%s2 + $0xd0] sm:$0xff]
        %v257 = vld [vmem:[%s2 + $0xd8] sm:$0xff]
        %v258 = vld [vmem:[%s2 + $0xe0] sm:$0xff]
        %v259 = vld [vmem:[%s2 + $0xe8] sm:$0xff]
        %v260 = vld [vmem:[%s2 + $0xf0] sm:$0xff]
        %v261 = vld [vmem:[%s2 + $0xf8] sm:$0xff]
        %v262 = vld [vmem:[%s195 + $0x1] sm:$0xff]
        %v263 = vld [vmem:[%s195 + $0x9] sm:$0xff]
        %v264 = vld [vmem:[%s1 + $0x100] sm:$0xff]
        %v265 = vld [vmem:[%s1 + $0x108] sm:$0xff]
        %v266 = vld [vmem:[%s1 + $0x110] sm:$0xff]
        %v267 = vld [vmem:[%s1 + $0x118] sm:$0xff]
        %v268 = vld [vmem:[%s1 + $0x120] sm:$0xff]
        %v269 = vld [vmem:[%s1 + $0x128] sm:$0xff]
        %v270 = vld [vmem:[%s1 + $0x130] sm:$0xff]
        %v271 = vld [vmem:[%s1 + $0x138] sm:$0xff]
        %v272 = vld [vmem:[%s1 + $0x140] sm:$0xff]
        %v273 = vld [vmem:[%s1 + $0x148] sm:$0xff]
        %v274 = vld [vmem:[%s1 + $0x150] sm:$0xff]
        %v275 = vld [vmem:[%s1 + $0x158] sm:$0xff]
        %v276 = vld [vmem:[%s1 + $0x160] sm:$0xff]
        %v277 = vld [vmem:[%s1 + $0x168] sm:$0xff]
        %v278 = vld [vmem:[%s1 + $0x170] sm:$0xff]
        %v279 = vld [vmem:[%s1 + $0x178] sm:$0xff]
        %v280 = vld [vmem:[%s1 + $0x180] sm:$0xff]
        %v281 = vld [vmem:[%s1 + $0x188] sm:$0xff]
        %v282 = vld [vmem:[%s1 + $0x190] sm:$0xff]
        %v283 = vld [vmem:[%s1 + $0x198] sm:$0xff]
        %v284 = vld [vmem:[%s1 + $0x1a0] sm:$0xff]
        %v285 = vld [vmem:[%s1 + $0x1a8] sm:$0xff]
        %v286 = vld [vmem:[%s1 + $0x1b0] sm:$0xff]
        %v287 = vld [vmem:[%s1 + $0x1b8] sm:$0xff]
        %v288 = vld [vmem:[%s1 + $0x1c0] sm:$0xff]
        %v289 = vld [vmem:[%s1 + $0x1c8] sm:$0xff]
        %v290 = vld [vmem:[%s1 + $0x1d0] sm:$0xff]
        %v291 = vld [vmem:[%s1 + $0x1d8] sm:$0xff]
        %v292 = vld [vmem:[%s1 + $0x1e0] sm:$0xff]
        %v293 = vld [vmem:[%s1 + $0x1e8] sm:$0xff]
        %v294 = vld [vmem:[%s1 + $0x1f0] sm:$0xff]
        %v295 = vld [vmem:[%s1 + $0x1f8] sm:$0xff]
        %v296 = vld [vmem:[%s2 + $0x100] sm:$0xff]
        %v297 = vld [vmem:[%s2 + $0x108] sm:$0xff]
        %v298 = vld [vmem:[%s2 + $0x110] sm:$0xff]
        %v299 = vld [vmem:[%s2 + $0x118] sm:$0xff]
        %v300 = vld [vmem:[%s2 + $0x120] sm:$0xff]
        %v301 = vld [vmem:[%s2 + $0x128] sm:$0xff]
        %v302 = vld [vmem:[%s2 + $0x130] sm:$0xff]
        %v303 = vld [vmem:[%s2 + $0x138] sm:$0xff]
        %v304 = vld [vmem:[%s2 + $0x140] sm:$0xff]
        %v305 = vld [vmem:[%s2 + $0x148] sm:$0xff]
        %v306 = vld [vmem:[%s2 + $0x150] sm:$0xff]
        %v307 = vld [vmem:[%s2 + $0x158] sm:$0xff]
        %v308 = vld [vmem:[%s2 + $0x160] sm:$0xff]
        %v309 = vld [vmem:[%s2 + $0x168] sm:$0xff]
        %v310 = vld [vmem:[%s2 + $0x170] sm:$0xff]
        %v311 = vld [vmem:[%s2 + $0x178] sm:$0xff]
        %v312 = vld [vmem:[%s2 + $0x180] sm:$0xff]
        %v313 = vld [vmem:[%s2 + $0x188] sm:$0xff]
        %v314 = vld [vmem:[%s2 + $0x190] sm:$0xff]
        %v315 = vld [vmem:[%s2 + $0x198] sm:$0xff]
        %v316 = vld [vmem:[%s2 + $0x1a0] sm:$0xff]
        %v317 = vld [vmem:[%s2 + $0x1a8] sm:$0xff]
        %v318 = vld [vmem:[%s2 + $0x1b0] sm:$0xff]
        %v319 = vld [vmem:[%s2 + $0x1b8] sm:$0xff]
        %v320 = vld [vmem:[%s2 + $0x1c0] sm:$0xff]
        %v321 = vld [vmem:[%s2 + $0x1c8] sm:$0xff]
        %v322 = vld [vmem:[%s2 + $0x1d0] sm:$0xff]
        %v323 = vld [vmem:[%s2 + $0x1d8] sm:$0xff]
        %v324 = vld [vmem:[%s2 + $0x1e0] sm:$0xff]
        %v325 = vld [vmem:[%s2 + $0x1e8] sm:$0xff]
        %v326 = vld [vmem:[%s2 + $0x1f0] sm:$0xff]
        %v327 = vld [vmem:[%s2 + $0x1f8] sm:$0xff]
        %328 = vmatprep.subr.mxu0 %v295
        %329 = vmatpush1.msra.mxu0 %v294
        %330 = vmatprep.subr.mxu0 %v293
        %331 = vmatpush1.msra.mxu0 %v292
        %332 = vmatprep.subr.mxu0 %v291
        %333 = vmatpush1.msra.mxu0 %v290
        %334 = vmatprep.subr.mxu0 %v289
        %335 = vmatpush1.msra.mxu0 %v288
        %336 = vmatprep.subr.mxu0 %v287
        %337 = vmatpush1.msra.mxu0 %v286
        %338 = vmatprep.subr.mxu0 %v285
        %339 = vmatpush1.msra.mxu0 %v284
        %340 = vmatprep.subr.mxu0 %v283
        %341 = vmatpush1.msra.mxu0 %v282
        %342 = vmatprep.subr.mxu0 %v281
        %343 = vmatpush1.msra.mxu0 %v280
        %344 = vmatprep.subr.mxu0 %v279
        %345 = vmatpush1.msra.mxu0 %v278
        %346 = vmatprep.subr.mxu0 %v277
        %347 = vmatpush1.msra.mxu0 %v276
        %348 = vmatprep.subr.mxu0 %v275
        %349 = vmatpush1.msra.mxu0 %v274
        %350 = vmatprep.subr.mxu0 %v273
        %351 = vmatpush1.msra.mxu0 %v272
        %352 = vmatprep.subr.mxu0 %v271
        %353 = vmatpush1.msra.mxu0 %v270
        %354 = vmatprep.subr.mxu0 %v269
        %355 = vmatpush1.msra.mxu0 %v268
        %356 = vmatprep.subr.mxu0 %v267
        %357 = vmatpush1.msra.mxu0 %v266
        %358 = vmatprep.subr.mxu0 %v265
        %359 = vmatpush1.msra.mxu0 %v264
        %360 = vmatprep.subr.mxu0 0.0
        %361 = vmatpush2.msra.mxu0 0.0
        %362 = vmatprep.subr.mxu0 0.0
        %363 = vmatpush2.msra.mxu0 0.0
        %364 = vmatprep.subr.mxu0 0.0
        %365 = vmatpush2.msra.mxu0 0.0
        %366 = vmatprep.subr.mxu0 0.0
        %367 = vmatpush2.msra.mxu0 0.0
        %368 = vmatprep.subr.mxu0 0.0
        %369 = vmatpush2.msra.mxu0 0.0
        %370 = vmatprep.subr.mxu0 0.0
        %371 = vmatpush2.msra.mxu0 0.0
        %372 = vmatprep.subr.mxu0 0.0
        %373 = vmatpush2.msra.mxu0 0.0
        %374 = vmatprep.subr.mxu0 0.0
        %375 = vmatpush2.msra.mxu0 0.0
        %376 = vmatprep.subr.mxu0 0.0
        %377 = vmatpush2.msra.mxu0 0.0
        %378 = vmatprep.subr.mxu0 0.0
        %379 = vmatpush2.msra.mxu0 0.0
        %380 = vmatprep.subr.mxu0 0.0
        %381 = vmatpush2.msra.mxu0 0.0
        %382 = vmatprep.subr.mxu0 0.0
        %383 = vmatpush2.msra.mxu0 0.0
        %384 = vmatprep.subr.mxu0 0.0
        %385 = vmatpush2.msra.mxu0 0.0
        %386 = vmatprep.subr.mxu0 0.0
        %387 = vmatpush2.msra.mxu0 0.0
        %388 = vmatprep.subr.mxu0 0.0
        %389 = vmatpush2.msra.mxu0 0.0
        %390 = vmatprep.subr.mxu0 0.0
        %391 = vmatpush2.msra.mxu0 0.0
        %392 = vmatprep.mubr.f32.mxu0 0.0
        %393 = vmatmul.mubr.f32.gmra.mxu0 %v262
        %v394 = vpop.f32.mrf.mxu0
        %v395 = vadd.f32 0.0, %v394
        %v396 = vpop.f32.mrf.mxu0
        %v397 = vadd.f32 0.0, %v396
        %398 = vmatprep.mubr.f32.mxu0 0.0
        %399 = vmatmul.mubr.f32.gmra.mxu0 %v263
        %v400 = vpop.f32.mrf.mxu0
        %v401 = vadd.f32 0.0, %v400
        %v402 = vpop.f32.mrf.mxu0
        %v403 = vadd.f32 0.0, %v402
        %404 = vdwg.mxu0
        %405 = vmatprep.subr.mxu0 %v327
        %406 = vmatpush1.msra.mxu0 %v326
        %407 = vmatprep.subr.mxu0 %v325
        %408 = vmatpush1.msra.mxu0 %v324
        %409 = vmatprep.subr.mxu0 %v323
        %410 = vmatpush1.msra.mxu0 %v322
        %411 = vmatprep.subr.mxu0 %v321
        %412 = vmatpush1.msra.mxu0 %v320
        %413 = vmatprep.subr.mxu0 %v319
        %414 = vmatpush1.msra.mxu0 %v318
        %415 = vmatprep.subr.mxu0 %v317
        %416 = vmatpush1.msra.mxu0 %v316
        %417 = vmatprep.subr.mxu0 %v315
        %418 = vmatpush1.msra.mxu0 %v314
        %419 = vmatprep.subr.mxu0 %v313
        %420 = vmatpush1.msra.mxu0 %v312
        %421 = vmatprep.subr.mxu0 %v311
        %422 = vmatpush1.msra.mxu0 %v310
        %423 = vmatprep.subr.mxu0 %v309
        %424 = vmatpush1.msra.mxu0 %v308
        %425 = vmatprep.subr.mxu0 %v307
        %426 = vmatpush1.msra.mxu0 %v306
        %427 = vmatprep.subr.mxu0 %v305
        %428 = vmatpush1.msra.mxu0 %v304
        %429 = vmatprep.subr.mxu0 %v303
        %430 = vmatpush1.msra.mxu0 %v302
        %431 = vmatprep.subr.mxu0 %v301
        %432 = vmatpush1.msra.mxu0 %v300
        %433 = vmatprep.subr.mxu0 %v299
        %434 = vmatpush1.msra.mxu0 %v298
        %435 = vmatprep.subr.mxu0 %v297
        %436 = vmatpush1.msra.mxu0 %v296
        %437 = vmatprep.subr.mxu0 0.0
        %438 = vmatpush2.msra.mxu0 0.0
        %439 = vmatprep.subr.mxu0 0.0
        %440 = vmatpush2.msra.mxu0 0.0
        %441 = vmatprep.subr.mxu0 0.0
        %442 = vmatpush2.msra.mxu0 0.0
        %443 = vmatprep.subr.mxu0 0.0
        %444 = vmatpush2.msra.mxu0 0.0
        %445 = vmatprep.subr.mxu0 0.0
        %446 = vmatpush2.msra.mxu0 0.0
        %447 = vmatprep.subr.mxu0 0.0
        %448 = vmatpush2.msra.mxu0 0.0
        %449 = vmatprep.subr.mxu0 0.0
        %450 = vmatpush2.msra.mxu0 0.0
        %451 = vmatprep.subr.mxu0 0.0
        %452 = vmatpush2.msra.mxu0 0.0
        %453 = vmatprep.subr.mxu0 0.0
        %454 = vmatpush2.msra.mxu0 0.0
        %455 = vmatprep.subr.mxu0 0.0
        %456 = vmatpush2.msra.mxu0 0.0
        %457 = vmatprep.subr.mxu0 0.0
        %458 = vmatpush2.msra.mxu0 0.0
        %459 = vmatprep.subr.mxu0 0.0
        %460 = vmatpush2.msra.mxu0 0.0
        %461 = vmatprep.subr.mxu0 0.0
        %462 = vmatpush2.msra.mxu0 0.0
        %463 = vmatprep.subr.mxu0 0.0
        %464 = vmatpush2.msra.mxu0 0.0
        %465 = vmatprep.subr.mxu0 0.0
        %466 = vmatpush2.msra.mxu0 0.0
        %467 = vmatprep.subr.mxu0 0.0
        %468 = vmatpush2.msra.mxu0 0.0
        %469 = vmatprep.mubr.f32.mxu0 0.0
        %470 = vmatmul.mubr.f32.gmra.mxu0 %v262
        %v471 = vpop.f32.mrf.mxu0
        %v472 = vadd.f32 0.0, %v471
        %v473 = vpop.f32.mrf.mxu0
        %v474 = vadd.f32 0.0, %v473
        %475 = vmatprep.mubr.f32.mxu0 0.0
        %476 = vmatmul.mubr.f32.gmra.mxu0 %v263
        %v477 = vpop.f32.mrf.mxu0
        %v478 = vadd.f32 0.0, %v477
        %v479 = vpop.f32.mrf.mxu0
        %v480 = vadd.f32 0.0, %v479
        %481 = vdwg.mxu0
        %482 = vmatprep.subr.mxu0 %v229
        %483 = vmatpush1.msra.mxu0 %v228
        %484 = vmatprep.subr.mxu0 %v227
        %485 = vmatpush1.msra.mxu0 %v226
        %486 = vmatprep.subr.mxu0 %v225
        %487 = vmatpush1.msra.mxu0 %v224
        %488 = vmatprep.subr.mxu0 %v223
        %489 = vmatpush1.msra.mxu0 %v222
        %490 = vmatprep.subr.mxu0 %v221
        %491 = vmatpush1.msra.mxu0 %v220
        %492 = vmatprep.subr.mxu0 %v219
        %493 = vmatpush1.msra.mxu0 %v218
        %494 = vmatprep.subr.mxu0 %v217
        %495 = vmatpush1.msra.mxu0 %v216
        %496 = vmatprep.subr.mxu0 %v215
        %497 = vmatpush1.msra.mxu0 %v214
        %498 = vmatprep.subr.mxu0 %v213
        %499 = vmatpush1.msra.mxu0 %v212
        %500 = vmatprep.subr.mxu0 %v211
        %501 = vmatpush1.msra.mxu0 %v210
        %502 = vmatprep.subr.mxu0 %v209
        %503 = vmatpush1.msra.mxu0 %v208
        %504 = vmatprep.subr.mxu0 %v207
        %505 = vmatpush1.msra.mxu0 %v206
        %506 = vmatprep.subr.mxu0 %v205
        %507 = vmatpush1.msra.mxu0 %v204
        %508 = vmatprep.subr.mxu0 %v203
        %509 = vmatpush1.msra.mxu0 %v202
        %510 = vmatprep.subr.mxu0 %v201
        %511 = vmatpush1.msra.mxu0 %v200
        %512 = vmatprep.subr.mxu0 %v199
        %513 = vmatpush1.msra.mxu0 %v198
        %514 = vmatprep.subr.mxu0 0.0
        %515 = vmatpush2.msra.mxu0 0.0
        %516 = vmatprep.subr.mxu0 0.0
        %517 = vmatpush2.msra.mxu0 0.0
        %518 = vmatprep.subr.mxu0 0.0
        %519 = vmatpush2.msra.mxu0 0.0
        %520 = vmatprep.subr.mxu0 0.0
        %521 = vmatpush2.msra.mxu0 0.0
        %522 = vmatprep.subr.mxu0 0.0
        %523 = vmatpush2.msra.mxu0 0.0
        %524 = vmatprep.subr.mxu0 0.0
        %525 = vmatpush2.msra.mxu0 0.0
        %526 = vmatprep.subr.mxu0 0.0
        %527 = vmatpush2.msra.mxu0 0.0
        %528 = vmatprep.subr.mxu0 0.0
        %529 = vmatpush2.msra.mxu0 0.0
        %530 = vmatprep.subr.mxu0 0.0
        %531 = vmatpush2.msra.mxu0 0.0
        %532 = vmatprep.subr.mxu0 0.0
        %533 = vmatpush2.msra.mxu0 0.0
        %534 = vmatprep.subr.mxu0 0.0
        %535 = vmatpush2.msra.mxu0 0.0
        %536 = vmatprep.subr.mxu0 0.0
        %537 = vmatpush2.msra.mxu0 0.0
        %538 = vmatprep.subr.mxu0 0.0
        %539 = vmatpush2.msra.mxu0 0.0
        %540 = vmatprep.subr.mxu0 0.0
        %541 = vmatpush2.msra.mxu0 0.0
        %542 = vmatprep.subr.mxu0 0.0
        %543 = vmatpush2.msra.mxu0 0.0
        %544 = vmatprep.subr.mxu0 0.0
        %545 = vmatpush2.msra.mxu0 0.0
        %546 = vmatprep.mubr.f32.mxu0 0.0
        %547 = vmatmul.mubr.f32.gmra.mxu0 %v196
        %v548 = vpop.f32.mrf.mxu0
        %v549 = vadd.f32 %v395, %v548
        %v550 = vpop.f32.mrf.mxu0
        %v551 = vadd.f32 %v397, %v550
        %552 = vmatprep.mubr.f32.mxu0 0.0
        %553 = vmatmul.mubr.f32.gmra.mxu0 %v197
        %v554 = vpop.f32.mrf.mxu0
        %v555 = vadd.f32 %v401, %v554
        %v556 = vpop.f32.mrf.mxu0
        %v557 = vadd.f32 %v403, %v556
        %558 = vdwg.mxu0
        %559 = vmatprep.subr.mxu0 %v261
        %560 = vmatpush1.msra.mxu0 %v260
        %561 = vmatprep.subr.mxu0 %v259
        %562 = vmatpush1.msra.mxu0 %v258
        %563 = vmatprep.subr.mxu0 %v257
        %564 = vmatpush1.msra.mxu0 %v256
        %565 = vmatprep.subr.mxu0 %v255
        %566 = vmatpush1.msra.mxu0 %v254
        %567 = vmatprep.subr.mxu0 %v253
        %568 = vmatpush1.msra.mxu0 %v252
        %569 = vmatprep.subr.mxu0 %v251
        %570 = vmatpush1.msra.mxu0 %v250
        %571 = vmatprep.subr.mxu0 %v249
        %572 = vmatpush1.msra.mxu0 %v248
        %573 = vmatprep.subr.mxu0 %v247
        %574 = vmatpush1.msra.mxu0 %v246
        %575 = vmatprep.subr.mxu0 %v245
        %576 = vmatpush1.msra.mxu0 %v244
        %577 = vmatprep.subr.mxu0 %v243
        %578 = vmatpush1.msra.mxu0 %v242
        %579 = vmatprep.subr.mxu0 %v241
        %580 = vmatpush1.msra.mxu0 %v240
        %581 = vmatprep.subr.mxu0 %v239
        %582 = vmatpush1.msra.mxu0 %v238
        %583 = vmatprep.subr.mxu0 %v237
        %584 = vmatpush1.msra.mxu0 %v236
        %585 = vmatprep.subr.mxu0 %v235
        %586 = vmatpush1.msra.mxu0 %v234
        %587 = vmatprep.subr.mxu0 %v233
        %588 = vmatpush1.msra.mxu0 %v232
        %589 = vmatprep.subr.mxu0 %v231
        %590 = vmatpush1.msra.mxu0 %v230
        %591 = vmatprep.subr.mxu0 0.0
        %592 = vmatpush2.msra.mxu0 0.0
        %593 = vmatprep.subr.mxu0 0.0
        %594 = vmatpush2.msra.mxu0 0.0
        %595 = vmatprep.subr.mxu0 0.0
        %596 = vmatpush2.msra.mxu0 0.0
        %597 = vmatprep.subr.mxu0 0.0
        %598 = vmatpush2.msra.mxu0 0.0
        %599 = vmatprep.subr.mxu0 0.0
        %600 = vmatpush2.msra.mxu0 0.0
        %601 = vmatprep.subr.mxu0 0.0
        %602 = vmatpush2.msra.mxu0 0.0
        %603 = vmatprep.subr.mxu0 0.0
        %604 = vmatpush2.msra.mxu0 0.0
        %605 = vmatprep.subr.mxu0 0.0
        %606 = vmatpush2.msra.mxu0 0.0
        %607 = vmatprep.subr.mxu0 0.0
        %608 = vmatpush2.msra.mxu0 0.0
        %609 = vmatprep.subr.mxu0 0.0
        %610 = vmatpush2.msra.mxu0 0.0
        %611 = vmatprep.subr.mxu0 0.0
        %612 = vmatpush2.msra.mxu0 0.0
        %613 = vmatprep.subr.mxu0 0.0
        %614 = vmatpush2.msra.mxu0 0.0
        %615 = vmatprep.subr.mxu0 0.0
        %616 = vmatpush2.msra.mxu0 0.0
        %617 = vmatprep.subr.mxu0 0.0
        %618 = vmatpush2.msra.mxu0 0.0
        %619 = vmatprep.subr.mxu0 0.0
        %620 = vmatpush2.msra.mxu0 0.0
        %621 = vmatprep.subr.mxu0 0.0
        %622 = vmatpush2.msra.mxu0 0.0
        %623 = vmatprep.mubr.f32.mxu0 0.0
        %624 = vmatmul.mubr.f32.gmra.mxu0 %v196
        %v625 = vpop.f32.mrf.mxu0
        %v626 = vadd.f32 %v472, %v625
        %v627 = vpop.f32.mrf.mxu0
        %v628 = vadd.f32 %v474, %v627
        %629 = vmatprep.mubr.f32.mxu0 0.0
        %630 = vmatmul.mubr.f32.gmra.mxu0 %v197
        %v631 = vpop.f32.mrf.mxu0
        %v632 = vadd.f32 %v478, %v631
        %v633 = vpop.f32.mrf.mxu0
        %v634 = vadd.f32 %v480, %v633
        %635 = vdwg.mxu0
        %v636 = vmul.f32 %v549, %v549
        %v637 = vmul.f32 %v551, %v551
        %v638 = vmul.f32 %v555, %v555
        %v639 = vmul.f32 %v557, %v557
        %v640 = vmul.f32 %v626, %v626
        %v641 = vmul.f32 %v628, %v628
        %v642 = vmul.f32 %v632, %v632
        %v643 = vmul.f32 %v634, %v634
        %v644 = vadd.f32 %v636, %v640
        %v645 = vadd.f32 %v637, %v641
        %v646 = vadd.f32 %v638, %v642
        %v647 = vadd.f32 %v639, %v643
        %v648 = vrsqrt.pop %v644
        %v649 = vmul.f32 %v644, %v648
        %vm650 = vcmp.eq.f32.partialorder %v644, inf
        %v651 = vsel %vm650, %v644, %v649
        %vm652 = vcmp.eq.f32.partialorder %v644, 0.0
        %v653 = vand.u32 %v644, 2147483648
        %v654 = vsel %vm652, %v653, %v651
        %v655 = vrsqrt.pop %v645
        %v656 = vmul.f32 %v645, %v655
        %vm657 = vcmp.eq.f32.partialorder %v645, inf
        %v658 = vsel %vm657, %v645, %v656
        %vm659 = vcmp.eq.f32.partialorder %v645, 0.0
        %v660 = vand.u32 %v645, 2147483648
        %v661 = vsel %vm659, %v660, %v658
        %v662 = vrsqrt.pop %v646
        %v663 = vmul.f32 %v646, %v662
        %vm664 = vcmp.eq.f32.partialorder %v646, inf
        %v665 = vsel %vm664, %v646, %v663
        %vm666 = vcmp.eq.f32.partialorder %v646, 0.0
        %v667 = vand.u32 %v646, 2147483648
        %v668 = vsel %vm666, %v667, %v665
        %v669 = vrsqrt.pop %v647
        %v670 = vmul.f32 %v647, %v669
        %vm671 = vcmp.eq.f32.partialorder %v647, inf
        %v672 = vsel %vm671, %v647, %v670
        %vm673 = vcmp.eq.f32.partialorder %v647, 0.0
        %v674 = vand.u32 %v647, 2147483648
        %v675 = vsel %vm673, %v674, %v672
        %v676 = vld [vmem:[%s3] sm:$0xff]
        %v677 = vld [vmem:[%s3 + $0x8] sm:$0xff]
        %v678 = vld [vmem:[%s3 + $0x10] sm:$0xff]
        %v679 = vld [vmem:[%s3 + $0x18] sm:$0xff]
        %v680 = vld [vmem:[%s3 + $0x20] sm:$0xff]
        %v681 = vld [vmem:[%s3 + $0x28] sm:$0xff]
        %v682 = vld [vmem:[%s3 + $0x30] sm:$0xff]
        %v683 = vld [vmem:[%s3 + $0x38] sm:$0xff]
        %v684 = vld [vmem:[%s3 + $0x40] sm:$0xff]
        %v685 = vld [vmem:[%s3 + $0x48] sm:$0xff]
        %v686 = vld [vmem:[%s3 + $0x50] sm:$0xff]
        %v687 = vld [vmem:[%s3 + $0x58] sm:$0xff]
        %v688 = vld [vmem:[%s3 + $0x60] sm:$0xff]
        %v689 = vld [vmem:[%s3 + $0x68] sm:$0xff]
        %v690 = vld [vmem:[%s3 + $0x70] sm:$0xff]
        %v691 = vld [vmem:[%s3 + $0x78] sm:$0xff]
        %v692 = vld [vmem:[%s3 + $0x80] sm:$0x1]
        %vm693 = vcmask 7168
        %v695 = vsel %vm693, %v661, 0
        %v698 = vsel %vm693, %v675, 0
        %vm700 = vcmask 1040384
        %v702 = vsel %vm700, %v692, 0
        %704 = vmatprep.subr.mxu0 0.0
        %705 = vmatpush1.msra.mxu0 %v691
        %706 = vmatprep.subr.mxu0 0.0
        %707 = vmatpush1.msra.mxu0 %v690
        %708 = vmatprep.subr.mxu0 0.0
        %709 = vmatpush1.msra.mxu0 %v689
        %710 = vmatprep.subr.mxu0 0.0
        %711 = vmatpush1.msra.mxu0 %v688
        %712 = vmatprep.subr.mxu0 0.0
        %713 = vmatpush1.msra.mxu0 %v687
        %714 = vmatprep.subr.mxu0 0.0
        %715 = vmatpush1.msra.mxu0 %v686
        %716 = vmatprep.subr.mxu0 0.0
        %717 = vmatpush1.msra.mxu0 %v685
        %718 = vmatprep.subr.mxu0 0.0
        %719 = vmatpush1.msra.mxu0 %v684
        %720 = vmatprep.subr.mxu0 0.0
        %721 = vmatpush1.msra.mxu0 %v683
        %722 = vmatprep.subr.mxu0 0.0
        %723 = vmatpush1.msra.mxu0 %v682
        %724 = vmatprep.subr.mxu0 0.0
        %725 = vmatpush1.msra.mxu0 %v681
        %726 = vmatprep.subr.mxu0 0.0
        %727 = vmatpush1.msra.mxu0 %v680
        %728 = vmatprep.subr.mxu0 0.0
        %729 = vmatpush1.msra.mxu0 %v679
        %730 = vmatprep.subr.mxu0 0.0
        %731 = vmatpush1.msra.mxu0 %v678
        %732 = vmatprep.subr.mxu0 0.0
        %733 = vmatpush1.msra.mxu0 %v677
        %734 = vmatprep.subr.mxu0 0.0
        %735 = vmatpush1.msra.mxu0 %v676
        %736 = vmatprep.subr.mxu0 0.0
        %737 = vmatpush2.msra.mxu0 0.0
        %738 = vmatprep.subr.mxu0 0.0
        %739 = vmatpush2.msra.mxu0 0.0
        %740 = vmatprep.subr.mxu0 0.0
        %741 = vmatpush2.msra.mxu0 0.0
        %742 = vmatprep.subr.mxu0 0.0
        %743 = vmatpush2.msra.mxu0 0.0
        %744 = vmatprep.subr.mxu0 0.0
        %745 = vmatpush2.msra.mxu0 0.0
        %746 = vmatprep.subr.mxu0 0.0
        %747 = vmatpush2.msra.mxu0 0.0
        %748 = vmatprep.subr.mxu0 0.0
        %749 = vmatpush2.msra.mxu0 0.0
        %750 = vmatprep.subr.mxu0 0.0
        %751 = vmatpush2.msra.mxu0 0.0
        %752 = vmatprep.subr.mxu0 0.0
        %753 = vmatpush2.msra.mxu0 0.0
        %754 = vmatprep.subr.mxu0 0.0
        %755 = vmatpush2.msra.mxu0 0.0
        %756 = vmatprep.subr.mxu0 0.0
        %757 = vmatpush2.msra.mxu0 0.0
        %758 = vmatprep.subr.mxu0 0.0
        %759 = vmatpush2.msra.mxu0 0.0
        %760 = vmatprep.subr.mxu0 0.0
        %761 = vmatpush2.msra.mxu0 0.0
        %762 = vmatprep.subr.mxu0 0.0
        %763 = vmatpush2.msra.mxu0 0.0
        %764 = vmatprep.subr.mxu0 0.0
        %765 = vmatpush2.msra.mxu0 0.0
        %766 = vmatprep.subr.mxu0 0.0
        %767 = vmatpush2.msra.mxu0 %v702
        %768 = vmatprep.mubr.f32.mxu0 %v695
        %769 = vmatmul.mubr.f32.gmra.mxu0 %v654
        %v770 = vpop.f32.mrf.mxu0
        %v771 = vadd.f32 0.0, %v770
        %v772 = vpop.f32.mrf.mxu0
        %773 = vmatprep.mubr.f32.mxu0 %v698
        %774 = vmatmul.mubr.f32.gmra.mxu0 %v668
        %v775 = vpop.f32.mrf.mxu0
        %v776 = vadd.f32 0.0, %v775
        %v777 = vpop.f32.mrf.mxu0
        %778 = vdwg.mxu0
        %vm779 = vcmp.le.f32.partialorder %v771, 0.0
        %vm780 = vcmp.le.f32.partialorder %v776, 0.0
        %v781 = vsel %vm779, 1e-05, %v771
        %v782 = vsel %vm780, 1e-05, %v776
        %v783 = vlog2.pop %v781
        %v784 = vmul.f32 %v783, 0.6931472
        %v785 = vlog2.pop %v782
        %v786 = vmul.f32 %v785, 0.6931472
        %787 = vst [vmem:[%s190] sm:$0xff] %v784
        %788 = vst [vmem:[%s190 + $0x8] sm:$0xff] %v786
        %s789 = sand.u32 %s115, 1
        %s790 = scalar_lea.sflag [#allocation3], %s789
        %s791 = sand.u32 %s115, 1
        %s792 = smul.addr %s791, 16
        %s793 = scalar_lea.vmem [#allocation2], %s792
        // Predicated region
        $region37: #{spectrogram.1} parent=35 // pred_check
          %p794 = pneg %p125
        $region38: #{spectrogram.1} parent=35 // pred_check_branch
          %796 = sbr.rel (%p794) target = $region40
        $region39: #{spectrogram.1} parent=35 // pred_region
          %s798 = ssub.s32 256, 256
          %799 = vsyncadd %s790, %s798
          %s800 = smul.addr %s18, 2
          %s801 = smul.addr %s800, 128
          %s802 = scalar_lea.hbm %s4, %s801
          %s803 = sshll.u32 %s793, 4
          %s804 = int_to_ptr.vmem [resolvable:$true] %s803
          %809 = dma.vmem_to_hbm [thread:$0]  %s804, 256, %s802, %s790, 128, 128, 8
        $region40: #{spectrogram.1} parent=35 // pred_fallthru
          _
      $region36: #{spectrogram.1} parent=5 // pred_fallthru
        _
      %p810 = scmp.le.s32.totalorder 2, %s13
      // Predicated region
      $region41: #{spectrogram.1} parent=5 // pred_check
        %p811 = pneg %p810
      $region42: #{spectrogram.1} parent=5 // pred_check_branch
        %813 = sbr.rel (%p811) target = $region44
      $region43: #{spectrogram.1} parent=5 // pred_region
        %s814 = ssub.s32 %s13, 2
        // Predicated region
        $region45: #{spectrogram.1} parent=43 // pred_check
          %p815 = pneg %p131
        $region46: #{spectrogram.1} parent=43 // pred_check_branch
          %817 = sbr.rel (%p815) target = $region48
        $region47: #{spectrogram.1} parent=43 // pred_region
          %s818 = sand.u32 %s116, 1
          %s819 = scalar_lea.sflag [#allocation3], %s818
          %s820 = sand.u32 %s116, 1
          %s821 = smul.addr %s820, 16
          %s822 = scalar_lea.vmem [#allocation2], %s821
          %823 = dma.done %s819, 256
        $region48: #{spectrogram.1} parent=43 // pred_fallthru
          _
      $region44: #{spectrogram.1} parent=5 // pred_fallthru
        _
    $region6: #{spectrogram.1} parent=1 // loop_footer
      %s17 = sadd.s32 1, %s13
    $region7: #{spectrogram.1} parent=1 // loop_footer_branch
      %12 = sbr.rel target = $region3
    $region8: #{spectrogram.1} parent=1 // loop_exit
      _
    %824 = vsyncpa [#allocation3], 1
    %s825 = scalar_lea.sflag [#allocation3], 1
    %826 = vsyncpa %s825, 1

</llo_original>
